<compile_context>
chip_gen: v7x
topology: tpu7x:2x2x1
jax: 0.10.0
libtpu: 0.0.40
codegen_flags: <defaults>
</compile_context>

<pallas_src>
import functools

import jax
import jax.numpy as jnp
from jax.experimental import pallas as pl
from jax.experimental.pallas import tpu as pltpu


def _add_noise_kernel(wav_ref, noise_ref, gain_ref, out_ref):
    wav = wav_ref[...].astype(jnp.float32)        # (rows, T)
    noise = noise_ref[...].astype(jnp.float32)    # (rows, T)

    # Per-row energies over the time (lane) axis.
    # NOTE: correct only because the block spans the full T axis.
    e_sig = jnp.sum(wav * wav, axis=-1, keepdims=True)        # (rows, 1)
    e_noise = jnp.sum(noise * noise, axis=-1, keepdims=True)  # (rows, 1)

    # scale = sqrt(E_sig / E_noise) * 10**(-snr/20); gain_ref holds 10**(-snr/20).
    scale = jnp.sqrt(e_sig) * jax.lax.rsqrt(e_noise) * gain_ref[...]

    out_ref[...] = (wav + scale * noise).astype(out_ref.dtype)


def _round_up(x, m):
    return (x + m - 1) // m * m


def _pick_row_tile(n_rows, t, itemsize, target_tile_bytes=2 << 20):
    """Largest sublane-aligned row count whose (rows, T) tile is ~target_tile_bytes."""
    sublane = 16 if itemsize == 2 else 8
    rows = (target_tile_bytes // max(1, t * itemsize)) // sublane * sublane
    rows = max(sublane, rows)
    return min(rows, _round_up(n_rows, sublane))


@functools.partial(jax.jit, static_argnames=("row_tile",))
def random_white_noise(wav, snr_bc, noise_key, *, row_tile=None):
    """wav: (B, C, T); snr_bc: (B, C) target SNR in dB; noise_key: jax PRNG key.

    Returns wav + scale * noise with N(0, 1) noise, where scale realizes the requested
    per-(batch, channel) SNR exactly (same math as torchaudio.functional.add_noise).
    """
    B, C, T = wav.shape
    R = B * C
    itemsize = jnp.dtype(wav.dtype).itemsize
    sublane = 16 if itemsize == 2 else 8

    rows = row_tile if row_tile is not None else _pick_row_tile(R, T, itemsize)
    rows = _round_up(max(int(rows), sublane), sublane)
    # TODO(synk): for very long T where a full row no longer fits in VMEM, restructure as
    # a two-pass reduction over a T grid axis (energy pass, then scale pass) instead of
    # keeping the full T extent in one block.
    R_pad = _round_up(R, rows)

    wav2 = wav.reshape(R, T)
    gain2 = jnp.power(10.0, -snr_bc.reshape(R, 1).astype(jnp.float32) / 20.0)
    if R_pad != R:
        wav2 = jnp.pad(wav2, ((0, R_pad - R), (0, 0)))
        gain2 = jnp.pad(gain2, ((0, R_pad - R), (0, 0)), constant_values=1.0)

    # Gaussian noise generated at the padded shape (so padded rows have nonzero energy
    # and never produce inf/nan); extra rows are discarded below.
    noise_dtype = wav.dtype if jnp.issubdtype(wav.dtype, jnp.floating) else jnp.float32
    noise2 = jax.random.normal(noise_key, (R_pad, T), dtype=noise_dtype)

    # Double-buffered wav + noise + out tiles (f32 working set) + headroom.
    tile_bytes = rows * T * 4
    vmem_limit = int(min(max(tile_bytes * 3 * 2 + (8 << 20), 32 << 20), 64 << 20))

    out = pl.pallas_call(
        _add_noise_kernel,
        out_shape=jax.ShapeDtypeStruct((R_pad, T), wav.dtype),
        grid=(R_pad // rows,),
        in_specs=[
            pl.BlockSpec((rows, T), lambda i: (i, 0)),
            pl.BlockSpec((rows, T), lambda i: (i, 0)),
            pl.BlockSpec((rows, 1), lambda i: (i, 0)),
        ],
        out_specs=pl.BlockSpec((rows, T), lambda i: (i, 0)),
        compiler_params=pltpu.CompilerParams(
            dimension_semantics=("parallel",),  # shards row blocks across TCs on v7x
            vmem_limit_bytes=vmem_limit,
        ),
    )(wav2, noise2, gain2)

    if R_pad != R:
        out = out[:R]
    return out.reshape(B, C, T)


class RandomWhiteNoise:
    """JAX/Pallas port of the PyTorch RandomWhiteNoise module."""

    def __init__(self, min_snr, max_snr):
        assert isinstance(min_snr, (int, float)), "Min. gain must be a scalar numeric value"
        assert isinstance(max_snr, (int, float)), "Max. gain must be a scalar numeric value"
        delta = max_snr - min_snr
        assert delta > 0, "Max. gain must be greater than min. gain"
        self.min_snr = float(min_snr)
        self.max_snr = float(max_snr)
        self.delta = float(delta)

    def sample_snr(self, key, wav):
        assert wav.ndim == 3, "Expected 3D tensor (batch, channel, time)"
        B, C, _ = wav.shape
        snr = jax.random.uniform(key, (B,), dtype=jnp.float32) * self.delta + self.min_snr
        return jnp.broadcast_to(snr[:, None], (B, C))

    def __call__(self, key, wav):
        k_snr, k_noise = jax.random.split(key)
        snr_bc = self.sample_snr(k_snr, wav)
        return random_white_noise(wav, snr_bc, k_noise)


if __name__ == "__main__":
    key = jax.random.PRNGKey(0)
    k_wav, k_call, k_snr, k_noise = jax.random.split(key, 4)

    B, C, T = 2, 4, 1024
    wav = jax.random.normal(k_wav, (B, C, T), dtype=jnp.float32)

    aug = RandomWhiteNoise(min_snr=0, max_snr=10)
    out = jax.block_until_ready(aug(k_call, wav))
    assert out.shape == (B, C, T) and out.dtype == wav.dtype
    assert bool(jnp.all(jnp.isfinite(out)))

    # Semantics check: by construction the injected (scaled) noise realizes exactly the
    # requested per-row SNR, independent of the particular noise sample drawn.
    snr_bc = aug.sample_snr(k_snr, wav)
    got = jax.block_until_ready(random_white_noise(wav, snr_bc, k_noise))
    added = got.astype(jnp.float32) - wav
    e_sig = jnp.sum(wav * wav, axis=-1)
    e_add = jnp.sum(added * added, axis=-1)
    realized_snr = 10.0 * (jnp.log10(e_sig) - jnp.log10(e_add))
    assert jnp.allclose(realized_snr, snr_bc, atol=5e-2), "realized SNR mismatch"

    # Sanity-check the Gaussian noise: standardized injected noise ~ N(0, 1).
    z = (added / jnp.std(added, axis=-1, keepdims=True)).reshape(-1)
    assert abs(float(jnp.mean(z))) < 0.1, "noise mean looks wrong"
    frac_1sigma = float(jnp.mean((jnp.abs(z) < 1.0).astype(jnp.float32)))
    assert abs(frac_1sigma - 0.6827) < 0.05, "noise distribution looks wrong"

    # Exercise the row-padding path (B*C not a multiple of the sublane tile).
    B2, C2, T2 = 3, 5, 256
    wav2 = jax.random.normal(k_wav, (B2, C2, T2), dtype=jnp.float32)
    snr2 = jnp.broadcast_to(jnp.linspace(-3.0, 9.0, B2)[:, None], (B2, C2)).astype(jnp.float32)
    got2 = jax.block_until_ready(random_white_noise(wav2, snr2, k_noise))
    assert got2.shape == (B2, C2, T2)
    added2 = got2.astype(jnp.float32) - wav2
    r2 = 10.0 * (
        jnp.log10(jnp.sum(wav2 * wav2, axis=-1)) - jnp.log10(jnp.sum(added2 * added2, axis=-1))
    )
    assert jnp.allclose(r2, snr2, atol=5e-2), "realized SNR mismatch (padded path)"

    print("KERNEL_OK")
</pallas_src>

<mosaic_0001>
module attributes {stable_mosaic.version = 11 : i64} {
  func.func @_add_noise_kernel(%arg0: i32, %arg1: memref<8x1024xf32, #tpu.memory_space<vmem>>, %arg2: memref<8x1024xf32, #tpu.memory_space<vmem>>, %arg3: memref<8x1xf32, #tpu.memory_space<vmem>>, %arg4: memref<8x1024xf32, #tpu.memory_space<vmem>>) attributes {dimension_semantics = [#tpu.dimension_semantics<parallel>], iteration_bounds = array<i64: 1>, scalar_prefetch = 0 : i64, scratch_operands = 0 : i64, tpu.core_type = #tpu.core_type<tc>, window_params = [{transform_indices = @transform_0, window_bounds = array<i64: 8, 1024>}, {transform_indices = @transform_1, window_bounds = array<i64: 8, 1024>}, {transform_indices = @transform_2, window_bounds = array<i64: 8, 1>}, {transform_indices = @transform_3, window_bounds = array<i64: 8, 1024>}]} {
    %c0 = arith.constant 0 : index
    %c0_0 = arith.constant 0 : index
    %0 = vector.load %arg1[%c0, %c0_0] : memref<8x1024xf32, #tpu.memory_space<vmem>>, vector<8x1024xf32>
    %c0_1 = arith.constant 0 : index
    %c0_2 = arith.constant 0 : index
    %1 = vector.load %arg2[%c0_1, %c0_2] : memref<8x1024xf32, #tpu.memory_space<vmem>>, vector<8x1024xf32>
    %2 = arith.mulf %0, %0 : vector<8x1024xf32>
    %cst = arith.constant dense<0.000000e+00> : vector<8xf32>
    %3 = vector.multi_reduction <add>, %2, %cst [1] : vector<8x1024xf32> to vector<8xf32>
    %4 = vector.shape_cast %3 : vector<8xf32> to vector<8x1xf32>
    %5 = arith.mulf %1, %1 : vector<8x1024xf32>
    %cst_3 = arith.constant dense<0.000000e+00> : vector<8xf32>
    %6 = vector.multi_reduction <add>, %5, %cst_3 [1] : vector<8x1024xf32> to vector<8xf32>
    %7 = vector.shape_cast %6 : vector<8xf32> to vector<8x1xf32>
    %8 = math.sqrt %4 : vector<8x1xf32>
    %9 = math.rsqrt %7 : vector<8x1xf32>
    %10 = arith.mulf %8, %9 : vector<8x1xf32>
    %c0_4 = arith.constant 0 : index
    %c0_5 = arith.constant 0 : index
    %11 = vector.load %arg3[%c0_4, %c0_5] : memref<8x1xf32, #tpu.memory_space<vmem>>, vector<8x1xf32>
    %12 = arith.mulf %10, %11 : vector<8x1xf32>
    %13 = vector.broadcast %12 : vector<8x1xf32> to vector<8x1024xf32>
    %14 = arith.mulf %13, %1 : vector<8x1024xf32>
    %15 = arith.addf %0, %14 : vector<8x1024xf32>
    %c0_6 = arith.constant 0 : index
    %c0_7 = arith.constant 0 : index
    %16 = vector.load %arg4[%c0_6, %c0_7] : memref<8x1024xf32, #tpu.memory_space<vmem>>, vector<8x1024xf32>
    tpu.vector_store %arg4[%c0_6, %c0_7], %15 {strides = array<i32>} : memref<8x1024xf32, #tpu.memory_space<vmem>>, vector<8x1024xf32>,
    return
  }
  func.func @transform_0(%arg0: i32) -> (i32, i32) {
    %c0_i32 = arith.constant 0 : i32
    %c0_i32_0 = arith.constant 0 : i32
    return %arg0, %c0_i32 : i32, i32
  }
  func.func @transform_1(%arg0: i32) -> (i32, i32) {
    %c0_i32 = arith.constant 0 : i32
    %c0_i32_0 = arith.constant 0 : i32
    return %arg0, %c0_i32 : i32, i32
  }
  func.func @transform_2(%arg0: i32) -> (i32, i32) {
    %c0_i32 = arith.constant 0 : i32
    %c0_i32_0 = arith.constant 0 : i32
    return %arg0, %c0_i32 : i32, i32
  }
  func.func @transform_3(%arg0: i32) -> (i32, i32) {
    %c0_i32 = arith.constant 0 : i32
    %c0_i32_0 = arith.constant 0 : i32
    return %arg0, %c0_i32 : i32, i32
  }
}

</mosaic_0001>

<llo_original>
// kernel: random_white_noise.1
$region0: #{random_white_noise.1}
  #allocation0 [shape = 'u32[]', space=smem, size = 0x4, offset = 0x4, fixed_abs, tag = 'smem constant byte address 0x4 - core index']
  #allocation1 [shape = 'u32[144,128]{1,0:T(1,128)}', space=vmem, size = 0x12000, scoped, tag = 'internal scratch']
  %s0 = inlined_call_operand.vmem [shape: f32[8,1024], index: 0, kind: input, shape index: {}]
  %s1 = inlined_call_operand.vmem [shape: f32[8,1024], index: 1, kind: input, shape index: {}]
  %s2 = inlined_call_operand.vmem [shape: f32[8,1], index: 2, kind: input, shape index: {}]
  %s3 = inlined_call_operand.vmem [shape: f32[8,1024], index: 3, kind: output, shape index: {}]
  %s4 = sld [smem:[#allocation0]]
  $region22: #{random_white_noise.1} parent=0
    _
  %s6 = ssub.s32 1, %s4
  %s7 = scalar_select 0, %s6, %s4
  // Predicated region
  $region2: #{random_white_noise.1} parent=0 // pred_check
    _
  $region3: #{random_white_noise.1} parent=0 // pred_check_branch
    %9 = sbr.rel (0) target = $region5
  $region4: #{random_white_noise.1} parent=0 // pred_region
    _
  $region5: #{random_white_noise.1} parent=0 // pred_fallthru
    _
  // Predicated region
  $region6: #{random_white_noise.1} parent=0 // pred_check
    _
  $region7: #{random_white_noise.1} parent=0 // pred_check_branch
    %11 = sbr.rel (0) target = $region9
  $region8: #{random_white_noise.1} parent=0 // pred_region
    _
  $region9: #{random_white_noise.1} parent=0 // pred_fallthru
    _
  // Predicated region
  $region10: #{random_white_noise.1} parent=0 // pred_check
    _
  $region11: #{random_white_noise.1} parent=0 // pred_check_branch
    %13 = sbr.rel (0) target = $region13
  $region12: #{random_white_noise.1} parent=0 // pred_region
    _
  $region13: #{random_white_noise.1} parent=0 // pred_fallthru
    _
  %v14 = vld [vmem:[%s0] sm:$0xff]
  %v15 = vld [vmem:[%s0 + $0x8] sm:$0xff]
  %v16 = vld [vmem:[%s0 + $0x10] sm:$0xff]
  %v17 = vld [vmem:[%s0 + $0x18] sm:$0xff]
  %v18 = vld [vmem:[%s0 + $0x20] sm:$0xff]
  %v19 = vld [vmem:[%s0 + $0x28] sm:$0xff]
  %v20 = vld [vmem:[%s0 + $0x30] sm:$0xff]
  %v21 = vld [vmem:[%s0 + $0x38] sm:$0xff]
  %v22 = vld [vmem:[%s1] sm:$0xff]
  %v23 = vld [vmem:[%s1 + $0x8] sm:$0xff]
  %v24 = vld [vmem:[%s1 + $0x10] sm:$0xff]
  %v25 = vld [vmem:[%s1 + $0x18] sm:$0xff]
  %v26 = vld [vmem:[%s1 + $0x20] sm:$0xff]
  %v27 = vld [vmem:[%s1 + $0x28] sm:$0xff]
  %v28 = vld [vmem:[%s1 + $0x30] sm:$0xff]
  %v29 = vld [vmem:[%s1 + $0x38] sm:$0xff]
  %v30 = vmul.f32 %v14, %v14
  %v31 = vmul.f32 %v15, %v15
  %v32 = vmul.f32 %v16, %v16
  %v33 = vmul.f32 %v17, %v17
  %v34 = vmul.f32 %v18, %v18
  %v35 = vmul.f32 %v19, %v19
  %v36 = vmul.f32 %v20, %v20
  %v37 = vmul.f32 %v21, %v21
  %v38 = vadd.f32 %v30, %v31
  %v39 = vadd.f32 %v38, %v32
  %v40 = vadd.f32 %v39, %v33
  %v41 = vadd.f32 %v40, %v34
  %v42 = vadd.f32 %v41, %v35
  %v43 = vadd.f32 %v42, %v36
  %v44 = vadd.f32 %v43, %v37
  %45 = vadd.xlane.f32.xlu0 %v44
  %v46 = vpop.xlane.xlu0 %45
  %v47 = vmul.f32 %v22, %v22
  %v48 = vmul.f32 %v23, %v23
  %v49 = vmul.f32 %v24, %v24
  %v50 = vmul.f32 %v25, %v25
  %v51 = vmul.f32 %v26, %v26
  %v52 = vmul.f32 %v27, %v27
  %v53 = vmul.f32 %v28, %v28
  %v54 = vmul.f32 %v29, %v29
  %v55 = vadd.f32 %v47, %v48
  %v56 = vadd.f32 %v55, %v49
  %v57 = vadd.f32 %v56, %v50
  %v58 = vadd.f32 %v57, %v51
  %v59 = vadd.f32 %v58, %v52
  %v60 = vadd.f32 %v59, %v53
  %v61 = vadd.f32 %v60, %v54
  %62 = vadd.xlane.f32.xlu0 %v61
  %v63 = vpop.xlane.xlu0 %62
  %v64 = vrsqrt.pop %v46
  %v65 = vmul.f32 %v46, %v64
  %vm66 = vcmp.eq.f32.partialorder %v46, inf
  %v67 = vsel %vm66, %v46, %v65
  %vm68 = vcmp.eq.f32.partialorder %v46, 0.0
  %v69 = vand.u32 %v46, 2147483648
  %v70 = vsel %vm68, %v69, %v67
  %v71 = vrsqrt.pop %v63
  %v72 = vmul.f32 %v70, %v71
  %v73 = vld [vmem:[%s2] sm:$0xff]
  %v74 = vmul.f32 %v72, %v73
  %76 = vset.pattern.permute.xlu0 0
  %77 = vperm.xlu0 %76, %v74
  %v78 = vpop.permute.xlu0 %77
  %v80 = vmul.f32 %v78, %v22
  %v81 = vmul.f32 %v78, %v23
  %v82 = vmul.f32 %v78, %v24
  %v83 = vmul.f32 %v78, %v25
  %v84 = vmul.f32 %v78, %v26
  %v85 = vmul.f32 %v78, %v27
  %v86 = vmul.f32 %v78, %v28
  %v87 = vmul.f32 %v78, %v29
  %v88 = vadd.f32 %v14, %v80
  %v89 = vadd.f32 %v15, %v81
  %v90 = vadd.f32 %v16, %v82
  %v91 = vadd.f32 %v17, %v83
  %v92 = vadd.f32 %v18, %v84
  %v93 = vadd.f32 %v19, %v85
  %v94 = vadd.f32 %v20, %v86
  %v95 = vadd.f32 %v21, %v87
  %96 = vst [vmem:[%s3] sm:$0xff] %v88
  %97 = vst [vmem:[%s3 + $0x8] sm:$0xff] %v89
  %98 = vst [vmem:[%s3 + $0x10] sm:$0xff] %v90
  %99 = vst [vmem:[%s3 + $0x18] sm:$0xff] %v91
  %100 = vst [vmem:[%s3 + $0x20] sm:$0xff] %v92
  %101 = vst [vmem:[%s3 + $0x28] sm:$0xff] %v93
  %102 = vst [vmem:[%s3 + $0x30] sm:$0xff] %v94
  %103 = vst [vmem:[%s3 + $0x38] sm:$0xff] %v95
  // Predicated region
  $region14: #{random_white_noise.1} parent=0 // pred_check
    _
  $region15: #{random_white_noise.1} parent=0 // pred_check_branch
    %105 = sbr.rel (0) target = $region17
  $region16: #{random_white_noise.1} parent=0 // pred_region
    _
  $region17: #{random_white_noise.1} parent=0 // pred_fallthru
    _
  // Predicated region
  $region18: #{random_white_noise.1} parent=0 // pred_check
    _
  $region19: #{random_white_noise.1} parent=0 // pred_check_branch
    %107 = sbr.rel (0) target = $region21
  $region20: #{random_white_noise.1} parent=0 // pred_region
    _
  $region21: #{random_white_noise.1} parent=0 // pred_fallthru
    _

</llo_original>
